<compile_context>
chip_gen: v7x
topology: tpu7x:2x2x1
jax: 0.10.0
libtpu: 0.0.40
codegen_flags: <defaults>
</compile_context>

<pallas_src>
import functools

import jax
import jax.numpy as jnp
from jax import lax
from jax.experimental import pallas as pl
from jax.experimental.pallas import tpu as pltpu

IN_CHANNELS = 3
CONV1_OUT_CHANNELS = 15
OUT_CHANNELS = 10
CONV2_IN_CHANNELS = CONV1_OUT_CHANNELS + IN_CHANNELS  # 18
BN_EPS = 1e-5
LANE_BUDGET = 8192  # max pixels (lanes) processed per grid step


# ----------------------------------------------------------------------------
# Tiling helpers
# ----------------------------------------------------------------------------
def _choose_tiling(H, W, lane_budget=LANE_BUDGET):
    """Pick (strip_rows RS, padded width Wc): RS even, RS | H, (RS*Wc) % 128 == 0."""
    def cands(Wc):
        return [rs for rs in range(2, H + 1, 2)
                if H % rs == 0 and (rs * Wc) % 128 == 0 and rs * Wc <= lane_budget]

    Wc = W
    c = cands(Wc)
    if not c:
        # pad width up to a multiple of 128 so any even strip height aligns
        Wc = ((W + 127) // 128) * 128
        c = cands(Wc)
    if not c:
        # TODO(synk): very large W (or odd H) would need multi-block-per-row tiling.
        raise NotImplementedError(f"unsupported spatial shape ({H}, {W})")
    multi = [rs for rs in c if H // rs >= 2]     # prefer >=2 strips for pipelining
    return (max(multi) if multi else max(c)), Wc


def _halo_block_size(L, Wc):
    """Smallest multiple of 128 that divides L and covers the 2 halo rows."""
    for hb in range(128, L + 1, 128):
        if L % hb == 0 and hb >= 2 * Wc:
            return hb
    return L


# ----------------------------------------------------------------------------
# Fused kernel: one row-strip of the image per grid step.
#   xm_ref  : (1, 3, L)   strip of the (vertically padded) input, flattened pixels
#   xh_ref  : (1, 3, HB)  next block; its first 2*Wc lanes are the 2 halo rows
#   w1_ref  : (15, 27)    conv1 weights (BN scale folded), k = (ky*3+kx)*3 + ci
#   bh_ref  : (15, 1)     folded conv1 bias + BN shift
#   wmix_ref: (5, 10, 15) [W2b^T, Wf00^T, Wf01^T, Wf10^T, Wf11^T]
#   b2_ref  : (10, 1)     conv2 bias + W2a @ convT bias
#   mask_ref: (4, L)      [x!=0, x!=Wc-1, x%2==0, y%2==0] as f32 0/1
#   out_ref : (1, 10, L)  final output strip (NCHW-flattened pixels on lanes)
# ----------------------------------------------------------------------------
def _fused_kernel(xm_ref, xh_ref, w1_ref, bh_ref, wmix_ref, b2_ref, mask_ref,
                  out_ref, *, Wc):
    L = out_ref.shape[-1]                         # RS * Wc (static)

    xm = xm_ref[0]                                # (3, L)
    xh = xh_ref[0][:, :2 * Wc]                    # (3, 2*Wc) halo rows below
    xbuf = jnp.concatenate([xm, xh], axis=1)      # (3, L + 2*Wc) padded strip rows

    m_xm1 = mask_ref[0:1, :]                      # 1.0 where column x-1 exists
    m_xp1 = mask_ref[1:2, :]                      # 1.0 where column x+1 exists
    col_e = mask_ref[2:3, :] > 0.5                # x % 2 == 0
    row_e = mask_ref[3:4, :] > 0.5                # y % 2 == 0

    # --- conv1 3x3 (+BN fold) as one K=27 MXU matmul on an in-VMEM im2col ----
    taps = []
    for ky in range(3):
        base = xbuf[:, ky * Wc: ky * Wc + L]                   # row shift = ky
        taps.append(jnp.roll(base, 1, axis=1) * m_xm1)          # kx = 0 (col x-1)
        taps.append(base)                                       # kx = 1 (col x)
        taps.append(jnp.roll(base, -1, axis=1) * m_xp1)         # kx = 2 (col x+1)
    x27 = jnp.concatenate(taps, axis=0)                         # (27, L)

    h = jnp.dot(w1_ref[...], x27, preferred_element_type=jnp.float32)
    h = jnp.maximum(h + bh_ref[...], 0.0)                       # (15, L) BN+ReLU

    # --- 2x2 max-pool, kept broadcast at full resolution ---------------------
    nb_c = jnp.where(col_e, jnp.roll(h, -1, axis=1), jnp.roll(h, 1, axis=1))
    hx = jnp.maximum(h, nb_c)                                   # column-pair max
    nb_r = jnp.where(row_e, jnp.roll(hx, -Wc, axis=1), jnp.roll(hx, Wc, axis=1))
    me = jnp.maximum(hx, nb_r)                                  # me[y,x] = pool[y//2, x//2]

    # --- convT folded into conv2:  out = W2b^T h + Wf[y%2,x%2]^T me + bias ---
    y = jnp.dot(wmix_ref[0], h, preferred_element_type=jnp.float32)
    z00 = jnp.dot(wmix_ref[1], me, preferred_element_type=jnp.float32)
    z01 = jnp.dot(wmix_ref[2], me, preferred_element_type=jnp.float32)
    z10 = jnp.dot(wmix_ref[3], me, preferred_element_type=jnp.float32)
    z11 = jnp.dot(wmix_ref[4], me, preferred_element_type=jnp.float32)
    zt = jnp.where(row_e, jnp.where(col_e, z00, z01), jnp.where(col_e, z10, z11))
    out_ref[0] = y + zt + b2_ref[...]


# ----------------------------------------------------------------------------
# Full forward pass (weight folding in plain JAX, all pixel work in the kernel)
# ----------------------------------------------------------------------------
def model_forward(x_nchw, params):
    N, Cin, H, W = x_nchw.shape
    assert Cin == IN_CHANNELS and H % 2 == 0 and W % 2 == 0
    # TODO(synk): BatchNorm2d uses inference (running-stats) semantics; PyTorch
    # train-mode per-batch statistics are not computed.

    RS, Wc = _choose_tiling(H, W)
    ns = H // RS
    L = RS * Wc
    HB = _halo_block_size(L, Wc)
    f = L // HB

    # Input: 1 zero row on top, RS-1 on the bottom (so the halo block of the
    # last strip stays in bounds), optional zero columns on the right.
    xpad = jnp.pad(x_nchw, ((0, 0), (0, 0), (1, RS - 1), (0, Wc - W)))
    xflat = xpad.reshape(N, IN_CHANNELS, (H + RS) * Wc)

    # ---- folded weights ------------------------------------------------------
    s = params["bn_gamma"] / jnp.sqrt(params["bn_var"] + BN_EPS)
    w1f = jnp.transpose(params["conv1_w"] * s[:, None, None, None],
                        (0, 2, 3, 1)).reshape(CONV1_OUT_CHANNELS, 9 * IN_CHANNELS)
    bh = ((params["conv1_b"] - params["bn_mean"]) * s
          + params["bn_beta"]).reshape(CONV1_OUT_CHANNELS, 1)
    w2 = params["conv2_w"][:, :, 0, 0]                       # (10, 18)
    w2a, w2b = w2[:, :IN_CHANNELS], w2[:, IN_CHANNELS:]      # (10,3), (10,15)
    # Wf[dy,dx][o,c] = sum_j w2a[o,j] * convt_w[c, j, dy, dx]
    wf = jnp.einsum("oj,cjyx->yxoc", w2a, params["convt1_w"]).reshape(
        4, OUT_CHANNELS, CONV1_OUT_CHANNELS)
    wmix = jnp.concatenate([w2b[None], wf], axis=0)          # (5, 10, 15)
    b2f = (params["conv2_b"] + w2a @ params["convt1_b"]).reshape(OUT_CHANNELS, 1)

    # ---- per-strip edge / parity masks (same for every strip) ---------------
    j = jnp.arange(L, dtype=jnp.int32)
    xcol, yrow = j % Wc, j // Wc
    masks = jnp.stack([xcol != 0, xcol != Wc - 1,
                       xcol % 2 == 0, yrow % 2 == 0]).astype(jnp.float32)  # (4, L)

    out_flat = pl.pallas_call(
        functools.partial(_fused_kernel, Wc=Wc),
        out_shape=jax.ShapeDtypeStruct((N, OUT_CHANNELS, H * Wc), jnp.float32),
        grid=(N, ns),
        in_specs=[
            pl.BlockSpec((1, IN_CHANNELS, L), lambda n, i: (n, 0, i)),            # strip
            pl.BlockSpec((1, IN_CHANNELS, HB), lambda n, i: (n, 0, (i + 1) * f)), # halo
            pl.BlockSpec((CONV1_OUT_CHANNELS, 9 * IN_CHANNELS), lambda n, i: (0, 0)),
            pl.BlockSpec((CONV1_OUT_CHANNELS, 1), lambda n, i: (0, 0)),
            pl.BlockSpec((5, OUT_CHANNELS, CONV1_OUT_CHANNELS), lambda n, i: (0, 0, 0)),
            pl.BlockSpec((OUT_CHANNELS, 1), lambda n, i: (0, 0)),
            pl.BlockSpec((4, L), lambda n, i: (0, 0)),
        ],
        out_specs=pl.BlockSpec((1, OUT_CHANNELS, L), lambda n, i: (n, 0, i)),
        compiler_params=pltpu.CompilerParams(
            dimension_semantics=("parallel", "parallel"),
            vmem_limit_bytes=32 * 1024 * 1024),
    )(xflat, xflat, w1f, bh, wmix, b2f, masks)

    y = out_flat.reshape(N, OUT_CHANNELS, H, Wc)             # free reshape -> NCHW
    if Wc != W:
        y = y[:, :, :, :W]
    return y


# ----------------------------------------------------------------------------
# Pure-JAX reference (independent path, via XLA convs) for validation
# ----------------------------------------------------------------------------
def reference_forward(x_nchw, params):
    x = jnp.transpose(x_nchw, (0, 2, 3, 1))
    w1_hwio = jnp.transpose(params["conv1_w"], (2, 3, 1, 0))
    h = lax.conv_general_dilated(x, w1_hwio, (1, 1), "SAME",
                                 dimension_numbers=("NHWC", "HWIO", "NHWC"))
    h = h + params["conv1_b"]
    scale = params["bn_gamma"] / jnp.sqrt(params["bn_var"] + BN_EPS)
    h = (h - params["bn_mean"]) * scale + params["bn_beta"]
    h = jnp.maximum(h, 0.0)
    m = lax.reduce_window(h, -jnp.inf, lax.max, (1, 2, 2, 1), (1, 2, 2, 1), "VALID")
    wt_flip = params["convt1_w"][:, :, ::-1, ::-1]
    wt_hwio = jnp.transpose(wt_flip, (2, 3, 0, 1))                     # (2,2,15,3)
    u = lax.conv_general_dilated(m, wt_hwio, (1, 1), [(1, 1), (1, 1)],
                                 lhs_dilation=(2, 2),
                                 dimension_numbers=("NHWC", "HWIO", "NHWC"))
    u = u + params["convt1_b"]
    cat = jnp.concatenate([u, h], axis=-1)
    w2 = params["conv2_w"][:, :, 0, 0]                                 # (10, 18)
    y = jnp.einsum("nhwc,oc->nhwo", cat, w2) + params["conv2_b"]
    return jnp.transpose(y, (0, 3, 1, 2))


def make_params(key):
    ks = jax.random.split(key, 10)
    f32 = jnp.float32
    return {
        "conv1_w": (0.1 * jax.random.normal(ks[0], (CONV1_OUT_CHANNELS, IN_CHANNELS, 3, 3))).astype(f32),
        "conv1_b": (0.1 * jax.random.normal(ks[1], (CONV1_OUT_CHANNELS,))).astype(f32),
        "bn_gamma": (1.0 + 0.1 * jax.random.normal(ks[2], (CONV1_OUT_CHANNELS,))).astype(f32),
        "bn_beta": (0.1 * jax.random.normal(ks[3], (CONV1_OUT_CHANNELS,))).astype(f32),
        "bn_mean": (0.1 * jax.random.normal(ks[4], (CONV1_OUT_CHANNELS,))).astype(f32),
        "bn_var": (jnp.abs(jax.random.normal(ks[5], (CONV1_OUT_CHANNELS,))) + 0.5).astype(f32),
        "convt1_w": (0.1 * jax.random.normal(ks[6], (CONV1_OUT_CHANNELS, IN_CHANNELS, 2, 2))).astype(f32),
        "convt1_b": (0.1 * jax.random.normal(ks[7], (IN_CHANNELS,))).astype(f32),
        "conv2_w": (0.1 * jax.random.normal(ks[8], (OUT_CHANNELS, CONV2_IN_CHANNELS, 1, 1))).astype(f32),
        "conv2_b": (0.1 * jax.random.normal(ks[9], (OUT_CHANNELS,))).astype(f32),
    }


if __name__ == "__main__":
    key = jax.random.PRNGKey(0)
    k_params, k_input = jax.random.split(key)
    params = make_params(k_params)

    # Small NCHW input consistent with the module (IN_CHANNELS=3).
    x = jax.random.normal(k_input, (2, IN_CHANNELS, 16, 16), dtype=jnp.float32)

    y = jax.block_until_ready(jax.jit(model_forward)(x, params))
    assert y.shape == (2, OUT_CHANNELS, 16, 16), y.shape

    y_ref = jax.block_until_ready(jax.jit(reference_forward)(x, params))
    if not jnp.allclose(y, y_ref, rtol=1e-3, atol=1e-3):
        raise AssertionError(
            "Pallas result mismatch vs reference, max abs err = "
            f"{float(jnp.max(jnp.abs(y - y_ref)))}")

    print("KERNEL_OK")
</pallas_src>

<mosaic_0001>
module attributes {stable_mosaic.version = 11 : i64} {
  func.func @_fused_kernel(%arg0: i32, %arg1: i32, %arg2: memref<1x3x128xf32, #tpu.memory_space<vmem>>, %arg3: memref<1x3x128xf32, #tpu.memory_space<vmem>>, %arg4: memref<15x27xf32, #tpu.memory_space<vmem>>, %arg5: memref<15x1xf32, #tpu.memory_space<vmem>>, %arg6: memref<5x10x15xf32, #tpu.memory_space<vmem>>, %arg7: memref<10x1xf32, #tpu.memory_space<vmem>>, %arg8: memref<4x128xf32, #tpu.memory_space<vmem>>, %arg9: memref<1x10x128xf32, #tpu.memory_space<vmem>>) attributes {dimension_semantics = [#tpu.dimension_semantics<parallel>, #tpu.dimension_semantics<parallel>], iteration_bounds = array<i64: 2, 2>, scalar_prefetch = 0 : i64, scratch_operands = 0 : i64, tpu.core_type = #tpu.core_type<tc>, window_params = [{transform_indices = @transform_0, window_bounds = array<i64: 1, 3, 128>}, {transform_indices = @transform_1, window_bounds = array<i64: 1, 3, 128>}, {pipeline_mode = #tpu.pipeline_mode<synchronous>, transform_indices = @transform_2, window_bounds = array<i64: 15, 27>}, {pipeline_mode = #tpu.pipeline_mode<synchronous>, transform_indices = @transform_3, window_bounds = array<i64: 15, 1>}, {pipeline_mode = #tpu.pipeline_mode<synchronous>, transform_indices = @transform_4, window_bounds = array<i64: 5, 10, 15>}, {pipeline_mode = #tpu.pipeline_mode<synchronous>, transform_indices = @transform_5, window_bounds = array<i64: 10, 1>}, {pipeline_mode = #tpu.pipeline_mode<synchronous>, transform_indices = @transform_6, window_bounds = array<i64: 4, 128>}, {transform_indices = @transform_7, window_bounds = array<i64: 1, 10, 128>}]} {
    %c0 = arith.constant 0 : index
    %c0_0 = arith.constant 0 : index
    %c0_1 = arith.constant 0 : index
    %0 = vector.load %arg2[%c0, %c0_0, %c0_1] : memref<1x3x128xf32, #tpu.memory_space<vmem>>, vector<1x3x128xf32>
    %1 = vector.shape_cast %0 : vector<1x3x128xf32> to vector<3x128xf32>
    %c0_2 = arith.constant 0 : index
    %c0_3 = arith.constant 0 : index
    %c0_4 = arith.constant 0 : index
    %2 = vector.load %arg3[%c0_2, %c0_3, %c0_4] : memref<1x3x128xf32, #tpu.memory_space<vmem>>, vector<1x3x128xf32>
    %3 = vector.shape_cast %2 : vector<1x3x128xf32> to vector<3x128xf32>
    %4 = vector.extract_strided_slice %3 {offsets = [0, 0], sizes = [3, 32], strides = [1, 1]} : vector<3x128xf32> to vector<3x32xf32>
    %5 = tpu.concatenate %1, %4 in 1 : vector<3x128xf32>, vector<3x32xf32> -> vector<3x160xf32>
    %c0_5 = arith.constant 0 : index
    %c0_6 = arith.constant 0 : index
    %6 = vector.load %arg8[%c0_5, %c0_6] : memref<4x128xf32, #tpu.memory_space<vmem>>, vector<1x128xf32>
    %c1 = arith.constant 1 : index
    %c0_7 = arith.constant 0 : index
    %7 = vector.load %arg8[%c1, %c0_7] : memref<4x128xf32, #tpu.memory_space<vmem>>, vector<1x128xf32>
    %c2 = arith.constant 2 : index
    %c0_8 = arith.constant 0 : index
    %8 = vector.load %arg8[%c2, %c0_8] : memref<4x128xf32, #tpu.memory_space<vmem>>, vector<1x128xf32>
    %cst = arith.constant 5.000000e-01 : f32
    %9 = vector.broadcast %cst : f32 to vector<1x128xf32>
    %10 = arith.cmpf ogt, %8, %9 : vector<1x128xf32>
    %c3 = arith.constant 3 : index
    %c0_9 = arith.constant 0 : index
    %11 = vector.load %arg8[%c3, %c0_9] : memref<4x128xf32, #tpu.memory_space<vmem>>, vector<1x128xf32>
    %cst_10 = arith.constant 5.000000e-01 : f32
    %12 = vector.broadcast %cst_10 : f32 to vector<1x128xf32>
    %13 = arith.cmpf ogt, %11, %12 : vector<1x128xf32>
    %14 = vector.extract_strided_slice %5 {offsets = [0, 0], sizes = [3, 128], strides = [1, 1]} : vector<3x160xf32> to vector<3x128xf32>
    %15 = vector.extract_strided_slice %14 {offsets = [0, 127], sizes = [3, 1], strides = [1, 1]} : vector<3x128xf32> to vector<3x1xf32>
    %16 = vector.extract_strided_slice %14 {offsets = [0, 0], sizes = [3, 127], strides = [1, 1]} : vector<3x128xf32> to vector<3x127xf32>
    %17 = tpu.concatenate %15, %16 in 1 : vector<3x1xf32>, vector<3x127xf32> -> vector<3x128xf32>
    %18 = vector.broadcast %6 : vector<1x128xf32> to vector<3x128xf32>
    %19 = arith.mulf %17, %18 : vector<3x128xf32>
    %20 = vector.extract_strided_slice %14 {offsets = [0, 1], sizes = [3, 127], strides = [1, 1]} : vector<3x128xf32> to vector<3x127xf32>
    %21 = vector.extract_strided_slice %14 {offsets = [0, 0], sizes = [3, 1], strides = [1, 1]} : vector<3x128xf32> to vector<3x1xf32>
    %22 = tpu.concatenate %20, %21 in 1 : vector<3x127xf32>, vector<3x1xf32> -> vector<3x128xf32>
    %23 = vector.broadcast %7 : vector<1x128xf32> to vector<3x128xf32>
    %24 = arith.mulf %22, %23 : vector<3x128xf32>
    %25 = vector.extract_strided_slice %5 {offsets = [0, 16], sizes = [3, 128], strides = [1, 1]} : vector<3x160xf32> to vector<3x128xf32>
    %26 = vector.extract_strided_slice %25 {offsets = [0, 127], sizes = [3, 1], strides = [1, 1]} : vector<3x128xf32> to vector<3x1xf32>
    %27 = vector.extract_strided_slice %25 {offsets = [0, 0], sizes = [3, 127], strides = [1, 1]} : vector<3x128xf32> to vector<3x127xf32>
    %28 = tpu.concatenate %26, %27 in 1 : vector<3x1xf32>, vector<3x127xf32> -> vector<3x128xf32>
    %29 = vector.broadcast %6 : vector<1x128xf32> to vector<3x128xf32>
    %30 = arith.mulf %28, %29 : vector<3x128xf32>
    %31 = vector.extract_strided_slice %25 {offsets = [0, 1], sizes = [3, 127], strides = [1, 1]} : vector<3x128xf32> to vector<3x127xf32>
    %32 = vector.extract_strided_slice %25 {offsets = [0, 0], sizes = [3, 1], strides = [1, 1]} : vector<3x128xf32> to vector<3x1xf32>
    %33 = tpu.concatenate %31, %32 in 1 : vector<3x127xf32>, vector<3x1xf32> -> vector<3x128xf32>
    %34 = vector.broadcast %7 : vector<1x128xf32> to vector<3x128xf32>
    %35 = arith.mulf %33, %34 : vector<3x128xf32>
    %36 = vector.extract_strided_slice %5 {offsets = [0, 32], sizes = [3, 128], strides = [1, 1]} : vector<3x160xf32> to vector<3x128xf32>
    %37 = vector.extract_strided_slice %36 {offsets = [0, 127], sizes = [3, 1], strides = [1, 1]} : vector<3x128xf32> to vector<3x1xf32>
    %38 = vector.extract_strided_slice %36 {offsets = [0, 0], sizes = [3, 127], strides = [1, 1]} : vector<3x128xf32> to vector<3x127xf32>
    %39 = tpu.concatenate %37, %38 in 1 : vector<3x1xf32>, vector<3x127xf32> -> vector<3x128xf32>
    %40 = vector.broadcast %6 : vector<1x128xf32> to vector<3x128xf32>
    %41 = arith.mulf %39, %40 : vector<3x128xf32>
    %42 = vector.extract_strided_slice %36 {offsets = [0, 1], sizes = [3, 127], strides = [1, 1]} : vector<3x128xf32> to vector<3x127xf32>
    %43 = vector.extract_strided_slice %36 {offsets = [0, 0], sizes = [3, 1], strides = [1, 1]} : vector<3x128xf32> to vector<3x1xf32>
    %44 = tpu.concatenate %42, %43 in 1 : vector<3x127xf32>, vector<3x1xf32> -> vector<3x128xf32>
    %45 = vector.broadcast %7 : vector<1x128xf32> to vector<3x128xf32>
    %46 = arith.mulf %44, %45 : vector<3x128xf32>
    %47 = tpu.concatenate %19, %14, %24, %30, %25, %35, %41, %36, %46 in 0 : vector<3x128xf32>, vector<3x128xf32>, vector<3x128xf32>, vector<3x128xf32>, vector<3x128xf32>, vector<3x128xf32>, vector<3x128xf32>, vector<3x128xf32>, vector<3x128xf32> -> vector<27x128xf32>
    %c0_11 = arith.constant 0 : index
    %c0_12 = arith.constant 0 : index
    %48 = vector.load %arg4[%c0_11, %c0_12] : memref<15x27xf32, #tpu.memory_space<vmem>>, vector<15x27xf32>
    %cst_13 = arith.constant dense<0.000000e+00> : vector<15x128xf32>
    %49 = tpu.matmul %48, %47, %cst_13 {dimension_numbers = #tpu.dot_dimension_numbers<[1], [0], [0], [1], [0, 0, 1, 1], [], []>} : vector<15x27xf32>, vector<27x128xf32>, vector<15x128xf32> -> vector<15x128xf32>
    %c0_14 = arith.constant 0 : index
    %c0_15 = arith.constant 0 : index
    %50 = vector.load %arg5[%c0_14, %c0_15] : memref<15x1xf32, #tpu.memory_space<vmem>>, vector<15x1xf32>
    %51 = vector.broadcast %50 : vector<15x1xf32> to vector<15x128xf32>
    %52 = arith.addf %49, %51 : vector<15x128xf32>
    %cst_16 = arith.constant 0.000000e+00 : f32
    %53 = vector.broadcast %cst_16 : f32 to vector<15x128xf32>
    %54 = arith.maximumf %52, %53 : vector<15x128xf32>
    %55 = vector.extract_strided_slice %54 {offsets = [0, 1], sizes = [15, 127], strides = [1, 1]} : vector<15x128xf32> to vector<15x127xf32>
    %56 = vector.extract_strided_slice %54 {offsets = [0, 0], sizes = [15, 1], strides = [1, 1]} : vector<15x128xf32> to vector<15x1xf32>
    %57 = tpu.concatenate %55, %56 in 1 : vector<15x127xf32>, vector<15x1xf32> -> vector<15x128xf32>
    %58 = vector.extract_strided_slice %54 {offsets = [0, 127], sizes = [15, 1], strides = [1, 1]} : vector<15x128xf32> to vector<15x1xf32>
    %59 = vector.extract_strided_slice %54 {offsets = [0, 0], sizes = [15, 127], strides = [1, 1]} : vector<15x128xf32> to vector<15x127xf32>
    %60 = tpu.concatenate %58, %59 in 1 : vector<15x1xf32>, vector<15x127xf32> -> vector<15x128xf32>
    %61 = vector.shape_cast %10 : vector<1x128xi1> to vector<1x128xi1>
    %62 = vector.broadcast %61 : vector<1x128xi1> to vector<15x128xi1>
    %63 = arith.select %62, %57, %60 : vector<15x128xi1>, vector<15x128xf32>
    %64 = arith.maximumf %54, %63 : vector<15x128xf32>
    %65 = vector.extract_strided_slice %64 {offsets = [0, 16], sizes = [15, 112], strides = [1, 1]} : vector<15x128xf32> to vector<15x112xf32>
    %66 = vector.extract_strided_slice %64 {offsets = [0, 0], sizes = [15, 16], strides = [1, 1]} : vector<15x128xf32> to vector<15x16xf32>
    %67 = tpu.concatenate %65, %66 in 1 : vector<15x112xf32>, vector<15x16xf32> -> vector<15x128xf32>
    %68 = vector.extract_strided_slice %64 {offsets = [0, 112], sizes = [15, 16], strides = [1, 1]} : vector<15x128xf32> to vector<15x16xf32>
    %69 = vector.extract_strided_slice %64 {offsets = [0, 0], sizes = [15, 112], strides = [1, 1]} : vector<15x128xf32> to vector<15x112xf32>
    %70 = tpu.concatenate %68, %69 in 1 : vector<15x16xf32>, vector<15x112xf32> -> vector<15x128xf32>
    %71 = vector.shape_cast %13 : vector<1x128xi1> to vector<1x128xi1>
    %72 = vector.broadcast %71 : vector<1x128xi1> to vector<15x128xi1>
    %73 = arith.select %72, %67, %70 : vector<15x128xi1>, vector<15x128xf32>
    %74 = arith.maximumf %64, %73 : vector<15x128xf32>
    %c0_17 = arith.constant 0 : index
    %c0_18 = arith.constant 0 : index
    %c0_19 = arith.constant 0 : index
    %75 = vector.load %arg6[%c0_17, %c0_18, %c0_19] : memref<5x10x15xf32, #tpu.memory_space<vmem>>, vector<1x10x15xf32>
    %76 = vector.shape_cast %75 : vector<1x10x15xf32> to vector<10x15xf32>
    %cst_20 = arith.constant dense<0.000000e+00> : vector<10x128xf32>
    %77 = tpu.matmul %76, %54, %cst_20 {dimension_numbers = #tpu.dot_dimension_numbers<[1], [0], [0], [1], [0, 0, 1, 1], [], []>} : vector<10x15xf32>, vector<15x128xf32>, vector<10x128xf32> -> vector<10x128xf32>
    %c1_21 = arith.constant 1 : index
    %c0_22 = arith.constant 0 : index
    %c0_23 = arith.constant 0 : index
    %78 = vector.load %arg6[%c1_21, %c0_22, %c0_23] : memref<5x10x15xf32, #tpu.memory_space<vmem>>, vector<1x10x15xf32>
    %79 = vector.shape_cast %78 : vector<1x10x15xf32> to vector<10x15xf32>
    %cst_24 = arith.constant dense<0.000000e+00> : vector<10x128xf32>
    %80 = tpu.matmul %79, %74, %cst_24 {dimension_numbers = #tpu.dot_dimension_numbers<[1], [0], [0], [1], [0, 0, 1, 1], [], []>} : vector<10x15xf32>, vector<15x128xf32>, vector<10x128xf32> -> vector<10x128xf32>
    %c2_25 = arith.constant 2 : index
    %c0_26 = arith.constant 0 : index
    %c0_27 = arith.constant 0 : index
    %81 = vector.load %arg6[%c2_25, %c0_26, %c0_27] : memref<5x10x15xf32, #tpu.memory_space<vmem>>, vector<1x10x15xf32>
    %82 = vector.shape_cast %81 : vector<1x10x15xf32> to vector<10x15xf32>
    %cst_28 = arith.constant dense<0.000000e+00> : vector<10x128xf32>
    %83 = tpu.matmul %82, %74, %cst_28 {dimension_numbers = #tpu.dot_dimension_numbers<[1], [0], [0], [1], [0, 0, 1, 1], [], []>} : vector<10x15xf32>, vector<15x128xf32>, vector<10x128xf32> -> vector<10x128xf32>
    %c3_29 = arith.constant 3 : index
    %c0_30 = arith.constant 0 : index
    %c0_31 = arith.constant 0 : index
    %84 = vector.load %arg6[%c3_29, %c0_30, %c0_31] : memref<5x10x15xf32, #tpu.memory_space<vmem>>, vector<1x10x15xf32>
    %85 = vector.shape_cast %84 : vector<1x10x15xf32> to vector<10x15xf32>
    %cst_32 = arith.constant dense<0.000000e+00> : vector<10x128xf32>
    %86 = tpu.matmul %85, %74, %cst_32 {dimension_numbers = #tpu.dot_dimension_numbers<[1], [0], [0], [1], [0, 0, 1, 1], [], []>} : vector<10x15xf32>, vector<15x128xf32>, vector<10x128xf32> -> vector<10x128xf32>
    %c4 = arith.constant 4 : index
    %c0_33 = arith.constant 0 : index
    %c0_34 = arith.constant 0 : index
    %87 = vector.load %arg6[%c4, %c0_33, %c0_34] : memref<5x10x15xf32, #tpu.memory_space<vmem>>, vector<1x10x15xf32>
    %88 = vector.shape_cast %87 : vector<1x10x15xf32> to vector<10x15xf32>
    %cst_35 = arith.constant dense<0.000000e+00> : vector<10x128xf32>
    %89 = tpu.matmul %88, %74, %cst_35 {dimension_numbers = #tpu.dot_dimension_numbers<[1], [0], [0], [1], [0, 0, 1, 1], [], []>} : vector<10x15xf32>, vector<15x128xf32>, vector<10x128xf32> -> vector<10x128xf32>
    %90 = vector.shape_cast %10 : vector<1x128xi1> to vector<1x128xi1>
    %91 = vector.broadcast %90 : vector<1x128xi1> to vector<10x128xi1>
    %92 = arith.select %91, %80, %83 : vector<10x128xi1>, vector<10x128xf32>
    %93 = vector.shape_cast %10 : vector<1x128xi1> to vector<1x128xi1>
    %94 = vector.broadcast %93 : vector<1x128xi1> to vector<10x128xi1>
    %95 = arith.select %94, %86, %89 : vector<10x128xi1>, vector<10x128xf32>
    %96 = vector.shape_cast %13 : vector<1x128xi1> to vector<1x128xi1>
    %97 = vector.broadcast %96 : vector<1x128xi1> to vector<10x128xi1>
    %98 = arith.select %97, %92, %95 : vector<10x128xi1>, vector<10x128xf32>
    %99 = arith.addf %77, %98 : vector<10x128xf32>
    %c0_36 = arith.constant 0 : index
    %c0_37 = arith.constant 0 : index
    %100 = vector.load %arg7[%c0_36, %c0_37] : memref<10x1xf32, #tpu.memory_space<vmem>>, vector<10x1xf32>
    %101 = vector.broadcast %100 : vector<10x1xf32> to vector<10x128xf32>
    %102 = arith.addf %99, %101 : vector<10x128xf32>
    %c0_38 = arith.constant 0 : index
    %c0_39 = arith.constant 0 : index
    %c0_40 = arith.constant 0 : index
    %103 = vector.load %arg9[%c0_38, %c0_39, %c0_40] : memref<1x10x128xf32, #tpu.memory_space<vmem>>, vector<1x10x128xf32>
    %104 = vector.shape_cast %103 : vector<1x10x128xf32> to vector<10x128xf32>
    %105 = vector.shape_cast %102 : vector<10x128xf32> to vector<1x10x128xf32>
    tpu.vector_store %arg9[%c0_38, %c0_39, %c0_40], %105 {strides = array<i32>} : memref<1x10x128xf32, #tpu.memory_space<vmem>>, vector<1x10x128xf32>,
    return
  }
  func.func @transform_0(%arg0: i32, %arg1: i32) -> (i32, i32, i32) {
    %c0_i32 = arith.constant 0 : i32
    %c0_i32_0 = arith.constant 0 : i32
    return %arg0, %c0_i32, %arg1 : i32, i32, i32
  }
  func.func @transform_1(%arg0: i32, %arg1: i32) -> (i32, i32, i32) {
    %c1_i32 = arith.constant 1 : i32
    %0 = arith.addi %arg1, %c1_i32 : i32
    %c1_i32_0 = arith.constant 1 : i32
    %1 = arith.muli %0, %c1_i32_0 : i32
    %c0_i32 = arith.constant 0 : i32
    %c0_i32_1 = arith.constant 0 : i32
    return %arg0, %c0_i32, %1 : i32, i32, i32
  }
  func.func @transform_2(%arg0: i32, %arg1: i32) -> (i32, i32) {
    %c0_i32 = arith.constant 0 : i32
    %c0_i32_0 = arith.constant 0 : i32
    %c0_i32_1 = arith.constant 0 : i32
    return %c0_i32, %c0_i32_0 : i32, i32
  }
  func.func @transform_3(%arg0: i32, %arg1: i32) -> (i32, i32) {
    %c0_i32 = arith.constant 0 : i32
    %c0_i32_0 = arith.constant 0 : i32
    %c0_i32_1 = arith.constant 0 : i32
    return %c0_i32, %c0_i32_0 : i32, i32
  }
  func.func @transform_4(%arg0: i32, %arg1: i32) -> (i32, i32, i32) {
    %c0_i32 = arith.constant 0 : i32
    %c0_i32_0 = arith.constant 0 : i32
    %c0_i32_1 = arith.constant 0 : i32
    %c0_i32_2 = arith.constant 0 : i32
    return %c0_i32, %c0_i32_0, %c0_i32_1 : i32, i32, i32
  }
  func.func @transform_5(%arg0: i32, %arg1: i32) -> (i32, i32) {
    %c0_i32 = arith.constant 0 : i32
    %c0_i32_0 = arith.constant 0 : i32
    %c0_i32_1 = arith.constant 0 : i32
    return %c0_i32, %c0_i32_0 : i32, i32
  }
  func.func @transform_6(%arg0: i32, %arg1: i32) -> (i32, i32) {
    %c0_i32 = arith.constant 0 : i32
    %c0_i32_0 = arith.constant 0 : i32
    %c0_i32_1 = arith.constant 0 : i32
    return %c0_i32, %c0_i32_0 : i32, i32
  }
  func.func @transform_7(%arg0: i32, %arg1: i32) -> (i32, i32, i32) {
    %c0_i32 = arith.constant 0 : i32
    %c0_i32_0 = arith.constant 0 : i32
    return %arg0, %c0_i32, %arg1 : i32, i32, i32
  }
}

</mosaic_0001>

<llo_original>
// kernel: model_forward.1
$region0: #{model_forward.1}
  #allocation0 [shape = 'u32[]', space=smem, size = 0x4, offset = 0x4, fixed_abs, tag = 'smem constant byte address 0x4 - core index']
  #allocation1 [shape = 'u32[144,128]{1,0:T(1,128)}', space=vmem, size = 0x12000, scoped, tag = 'internal scratch']
  %s0 = inlined_call_operand.vmem [shape: f32[2,3,384], index: 0, kind: input, shape index: {}, may-alias: {0,1}]
  %s1 = inlined_call_operand.vmem [shape: f32[2,3,384], index: 1, kind: input, shape index: {}, may-alias: {0,1}]
  %s2 = inlined_call_operand.vmem [shape: f32[15,27], index: 2, kind: input, shape index: {}]
  %s3 = inlined_call_operand.vmem [shape: f32[15,1], index: 3, kind: input, shape index: {}]
  %s4 = inlined_call_operand.vmem [shape: f32[5,10,15], index: 4, kind: input, shape index: {}]
  %s5 = inlined_call_operand.vmem [shape: f32[10,1], index: 5, kind: input, shape index: {}]
  %s6 = inlined_call_operand.vmem [shape: f32[4,128], index: 6, kind: input, shape index: {}]
  %s7 = inlined_call_operand.vmem [shape: f32[2,10,256], index: 7, kind: output, shape index: {}]
  %s8 = sld [smem:[#allocation0]]
  $region95: #{model_forward.1} parent=0
    _
  %s10 = ssub.s32 1, %s8
  %s11 = scalar_select 0, %s10, %s8
  $region1: #{model_forward.1} parent=0
    #allocation2 [shape = 'u8[16384]{0}', space=vmem, size = 0x4000, scoped, tag = 'output window, operand 0']
    loop: start=0, step=1, limit=6
    $region2: #{model_forward.1} parent=1 // loop_pre_header
      _
    $region3: #{model_forward.1} parent=1 // loop_header
      %s13 = sphi 0, %s17
      %p14 = scmp.ge.s32.totalorder %s13, 6
      %s20 = sphi 0, %s32
      %s21 = sphi 0, %s28
      %s22 = sphi 0, %s20
      %s23 = sphi 0, %s21
      %s24 = sphi 0, %s22
      %s25 = sphi 0, %s23
      %s37 = sphi 0, %s39
      %s40 = sphi 0, %s37
      %s41 = sphi 0, %s40
      %s57 = sphi 0, %s41
      %s67 = sphi 0, %s69
      %s70 = sphi 0, %s67
      %s71 = sphi 0, %s70
      %s87 = sphi 0, %s71
      %s91 = sphi 0, %s91
      %s93 = sphi 0, %s91
      %s94 = sphi 0, %s93
      %s108 = sphi 0, %s94
      %s112 = sphi 0, %s112
      %s114 = sphi 0, %s112
      %s115 = sphi 0, %s114
      %s129 = sphi 0, %s115
      %s133 = sphi 0, %s133
      %s135 = sphi 0, %s133
      %s136 = sphi 0, %s135
      %s150 = sphi 0, %s136
      %s154 = sphi 0, %s154
      %s156 = sphi 0, %s154
      %s157 = sphi 0, %s156
      %s171 = sphi 0, %s157
      %s175 = sphi 0, %s175
      %s177 = sphi 0, %s175
      %s178 = sphi 0, %s177
      %s192 = sphi 0, %s178
      %s200 = sphi 0, %s202
      %s203 = sphi 0, %s200
      %s204 = sphi 0, %s203
      %s220 = sphi 0, %s204
    $region4: #{model_forward.1} parent=1 // loop_header_branch
      %16 = sbr.rel (%p14) target = $region8
    $region5: #{model_forward.1} parent=1 // loop_body
      %s18 = ssub.s32 %s13, 1
      %s19 = ssub.s32 %s13, 2
      %s26 = sadd.s32 1, %s21
      %p27 = scmp.ge.s32.totalorder %s26, 2
      %s28 = scalar_select %p27, 0, %s26
      %s29 = sadd.s32 1, %s20
      %s30 = scalar_select %p27, %s29, %s20
      %p31 = scmp.ge.s32.totalorder %s30, 2
      %s32 = scalar_select %p31, 0, %s30
      %s33 = ssub.s32 %s20, %s32
      %s34 = ssub.s32 %s21, %s28
      %s35 = sor.u32 %s33, %s34
      %p36 = scmp.eq.s32.totalorder %s35, 0
      %s38 = sadd.s32 %s37, 1
      %s39 = scalar_select %p36, %s37, %s38
      %p42 = pneg %p36
      %p43 = scmp.eq.s32.totalorder %s13, 3
      %p44 = por %p42, %p43
      %p45 = scmp.ne.s32.totalorder %s37, %s40
      %p46 = scmp.eq.s32.totalorder %s13, 0
      %p47 = por %p45, %p46
      %p48 = scmp.ne.s32.totalorder %s37, %s40
      %p49 = scmp.eq.s32.totalorder %s18, 3
      %p50 = por %p48, %p49
      %p51 = scmp.ne.s32.totalorder %s40, %s41
      %p52 = scmp.eq.s32.totalorder %s18, 0
      %p53 = por %p51, %p52
      %p54 = scmp.ne.s32.totalorder %s40, %s41
      %p55 = scmp.eq.s32.totalorder %s19, 3
      %p56 = por %p54, %p55
      %p58 = scmp.ne.s32.totalorder %s41, %s57
      %p59 = scmp.eq.s32.totalorder %s19, 0
      %p60 = por %p58, %p59
      %s61 = sadd.s32 %s21, 1
      %s62 = sadd.s32 %s28, 1
      %s63 = ssub.s32 %s20, %s32
      %s64 = ssub.s32 %s61, %s62
      %s65 = sor.u32 %s63, %s64
      %p66 = scmp.eq.s32.totalorder %s65, 0
      %s68 = sadd.s32 %s67, 1
      %s69 = scalar_select %p66, %s67, %s68
      %p72 = pneg %p66
      %p73 = scmp.eq.s32.totalorder %s13, 3
      %p74 = por %p72, %p73
      %p75 = scmp.ne.s32.totalorder %s67, %s70
      %p76 = scmp.eq.s32.totalorder %s13, 0
      %p77 = por %p75, %p76
      %p78 = scmp.ne.s32.totalorder %s67, %s70
      %p79 = scmp.eq.s32.totalorder %s18, 3
      %p80 = por %p78, %p79
      %p81 = scmp.ne.s32.totalorder %s70, %s71
      %p82 = scmp.eq.s32.totalorder %s18, 0
      %p83 = por %p81, %p82
      %p84 = scmp.ne.s32.totalorder %s70, %s71
      %p85 = scmp.eq.s32.totalorder %s19, 3
      %p86 = por %p84, %p85
      %p88 = scmp.ne.s32.totalorder %s71, %s87
      %p89 = scmp.eq.s32.totalorder %s19, 0
      %p90 = por %p88, %p89
      %s92 = sadd.s32 %s91, 1
      %p95 = scmp.eq.s32.totalorder %s13, 3
      %p96 = scmp.ne.s32.totalorder %s91, %s93
      %p97 = scmp.eq.s32.totalorder %s13, 0
      %p98 = por %p96, %p97
      %p99 = scmp.ne.s32.totalorder %s91, %s93
      %p100 = scmp.eq.s32.totalorder %s18, 3
      %p101 = por %p99, %p100
      %p102 = scmp.ne.s32.totalorder %s93, %s94
      %p103 = scmp.eq.s32.totalorder %s18, 0
      %p104 = por %p102, %p103
      %p105 = scmp.ne.s32.totalorder %s93, %s94
      %p106 = scmp.eq.s32.totalorder %s19, 3
      %p107 = por %p105, %p106
      %p109 = scmp.ne.s32.totalorder %s94, %s108
      %p110 = scmp.eq.s32.totalorder %s19, 0
      %p111 = por %p109, %p110
      %s113 = sadd.s32 %s112, 1
      %p116 = scmp.eq.s32.totalorder %s13, 3
      %p117 = scmp.ne.s32.totalorder %s112, %s114
      %p118 = scmp.eq.s32.totalorder %s13, 0
      %p119 = por %p117, %p118
      %p120 = scmp.ne.s32.totalorder %s112, %s114
      %p121 = scmp.eq.s32.totalorder %s18, 3
      %p122 = por %p120, %p121
      %p123 = scmp.ne.s32.totalorder %s114, %s115
      %p124 = scmp.eq.s32.totalorder %s18, 0
      %p125 = por %p123, %p124
      %p126 = scmp.ne.s32.totalorder %s114, %s115
      %p127 = scmp.eq.s32.totalorder %s19, 3
      %p128 = por %p126, %p127
      %p130 = scmp.ne.s32.totalorder %s115, %s129
      %p131 = scmp.eq.s32.totalorder %s19, 0
      %p132 = por %p130, %p131
      %s134 = sadd.s32 %s133, 1
      %p137 = scmp.eq.s32.totalorder %s13, 3
      %p138 = scmp.ne.s32.totalorder %s133, %s135
      %p139 = scmp.eq.s32.totalorder %s13, 0
      %p140 = por %p138, %p139
      %p141 = scmp.ne.s32.totalorder %s133, %s135
      %p142 = scmp.eq.s32.totalorder %s18, 3
      %p143 = por %p141, %p142
      %p144 = scmp.ne.s32.totalorder %s135, %s136
      %p145 = scmp.eq.s32.totalorder %s18, 0
      %p146 = por %p144, %p145
      %p147 = scmp.ne.s32.totalorder %s135, %s136
      %p148 = scmp.eq.s32.totalorder %s19, 3
      %p149 = por %p147, %p148
      %p151 = scmp.ne.s32.totalorder %s136, %s150
      %p152 = scmp.eq.s32.totalorder %s19, 0
      %p153 = por %p151, %p152
      %s155 = sadd.s32 %s154, 1
      %p158 = scmp.eq.s32.totalorder %s13, 3
      %p159 = scmp.ne.s32.totalorder %s154, %s156
      %p160 = scmp.eq.s32.totalorder %s13, 0
      %p161 = por %p159, %p160
      %p162 = scmp.ne.s32.totalorder %s154, %s156
      %p163 = scmp.eq.s32.totalorder %s18, 3
      %p164 = por %p162, %p163
      %p165 = scmp.ne.s32.totalorder %s156, %s157
      %p166 = scmp.eq.s32.totalorder %s18, 0
      %p167 = por %p165, %p166
      %p168 = scmp.ne.s32.totalorder %s156, %s157
      %p169 = scmp.eq.s32.totalorder %s19, 3
      %p170 = por %p168, %p169
      %p172 = scmp.ne.s32.totalorder %s157, %s171
      %p173 = scmp.eq.s32.totalorder %s19, 0
      %p174 = por %p172, %p173
      %s176 = sadd.s32 %s175, 1
      %p179 = scmp.eq.s32.totalorder %s13, 3
      %p180 = scmp.ne.s32.totalorder %s175, %s177
      %p181 = scmp.eq.s32.totalorder %s13, 0
      %p182 = por %p180, %p181
      %p183 = scmp.ne.s32.totalorder %s175, %s177
      %p184 = scmp.eq.s32.totalorder %s18, 3
      %p185 = por %p183, %p184
      %p186 = scmp.ne.s32.totalorder %s177, %s178
      %p187 = scmp.eq.s32.totalorder %s18, 0
      %p188 = por %p186, %p187
      %p189 = scmp.ne.s32.totalorder %s177, %s178
      %p190 = scmp.eq.s32.totalorder %s19, 3
      %p191 = por %p189, %p190
      %p193 = scmp.ne.s32.totalorder %s178, %s192
      %p194 = scmp.eq.s32.totalorder %s19, 0
      %p195 = por %p193, %p194
      %s196 = ssub.s32 %s20, %s32
      %s197 = ssub.s32 %s21, %s28
      %s198 = sor.u32 %s196, %s197
      %p199 = scmp.eq.s32.totalorder %s198, 0
      %s201 = sadd.s32 %s200, 1
      %s202 = scalar_select %p199, %s200, %s201
      %p205 = pneg %p199
      %p206 = scmp.eq.s32.totalorder %s13, 3
      %p207 = por %p205, %p206
      %p208 = scmp.ne.s32.totalorder %s200, %s203
      %p209 = scmp.eq.s32.totalorder %s13, 0
      %p210 = por %p208, %p209
      %p211 = scmp.ne.s32.totalorder %s200, %s203
      %p212 = scmp.eq.s32.totalorder %s18, 3
      %p213 = por %p211, %p212
      %p214 = scmp.ne.s32.totalorder %s203, %s204
      %p215 = scmp.eq.s32.totalorder %s18, 0
      %p216 = por %p214, %p215
      %p217 = scmp.ne.s32.totalorder %s203, %s204
      %p218 = scmp.eq.s32.totalorder %s19, 3
      %p219 = por %p217, %p218
      %p221 = scmp.ne.s32.totalorder %s204, %s220
      %p222 = scmp.eq.s32.totalorder %s19, 0
      %p223 = por %p221, %p222
      %p224 = scmp.le.s32.totalorder 1, %s13
      %p225 = scmp.lt.s32.totalorder %s13, 5
      %p226 = pnand %p224, %p225
      %p227 = pneg %p226
      // Predicated region
      $region9: #{model_forward.1} parent=5 // pred_check
        _
      $region10: #{model_forward.1} parent=5 // pred_check_branch
        %229 = sbr.rel (%p226) target = $region12
      $region11: #{model_forward.1} parent=5 // pred_region
        %s230 = ssub.s32 %s13, 1
        // Predicated region
        $region13: #{model_forward.1} parent=11 // pred_check
          %p231 = pneg %p104
        $region14: #{model_forward.1} parent=11 // pred_check_branch
          %233 = sbr.rel (%p231) target = $region16
        $region15: #{model_forward.1} parent=11 // pred_region
          _
        $region16: #{model_forward.1} parent=11 // pred_fallthru
          _
        // Predicated region
        $region17: #{model_forward.1} parent=11 // pred_check
          %p234 = pneg %p125
        $region18: #{model_forward.1} parent=11 // pred_check_branch
          %236 = sbr.rel (%p234) target = $region20
        $region19: #{model_forward.1} parent=11 // pred_region
          _
        $region20: #{model_forward.1} parent=11 // pred_fallthru
          _
        // Predicated region
        $region21: #{model_forward.1} parent=11 // pred_check
          %p237 = pneg %p146
        $region22: #{model_forward.1} parent=11 // pred_check_branch
          %239 = sbr.rel (%p237) target = $region24
        $region23: #{model_forward.1} parent=11 // pred_region
          _
        $region24: #{model_forward.1} parent=11 // pred_fallthru
          _
        // Predicated region
        $region25: #{model_forward.1} parent=11 // pred_check
          %p240 = pneg %p167
        $region26: #{model_forward.1} parent=11 // pred_check_branch
          %242 = sbr.rel (%p240) target = $region28
        $region27: #{model_forward.1} parent=11 // pred_region
          _
        $region28: #{model_forward.1} parent=11 // pred_fallthru
          _
        // Predicated region
        $region29: #{model_forward.1} parent=11 // pred_check
          %p243 = pneg %p188
        $region30: #{model_forward.1} parent=11 // pred_check_branch
          %245 = sbr.rel (%p243) target = $region32
        $region31: #{model_forward.1} parent=11 // pred_region
          _
        $region32: #{model_forward.1} parent=11 // pred_fallthru
          _
      $region12: #{model_forward.1} parent=5 // pred_fallthru
        _
      %p246 = scmp.lt.s32.totalorder %s13, 4
      // Predicated region
      $region33: #{model_forward.1} parent=5 // pred_check
        %p247 = pneg %p246
      $region34: #{model_forward.1} parent=5 // pred_check_branch
        %249 = sbr.rel (%p247) target = $region36
      $region35: #{model_forward.1} parent=5 // pred_region
        // Predicated region
        $region37: #{model_forward.1} parent=35 // pred_check
          %p250 = pneg %p47
        $region38: #{model_forward.1} parent=35 // pred_check_branch
          %252 = sbr.rel (%p250) target = $region40
        $region39: #{model_forward.1} parent=35 // pred_region
          %p253 = scmp.lt.s32.totalorder %s20, 1
          %s254 = scalar_select %p253, %s20, 1
          %p255 = scmp.lt.s32.totalorder %s21, 2
          %s256 = scalar_select %p255, %s21, 2
          %s257 = smul.addr %s254, 3
          %s258 = sadd.s32 %s256, %s257
          %s259 = smul.addr %s258, 4
          %s260 = scalar_lea.vmem %s0, %s259
        $region40: #{model_forward.1} parent=35 // pred_fallthru
          _
        // Predicated region
        $region41: #{model_forward.1} parent=35 // pred_check
          %p261 = pneg %p77
        $region42: #{model_forward.1} parent=35 // pred_check_branch
          %263 = sbr.rel (%p261) target = $region44
        $region43: #{model_forward.1} parent=35 // pred_region
          %s264 = sadd.s32 %s21, 1
          %p265 = scmp.lt.s32.totalorder %s20, 1
          %s266 = scalar_select %p265, %s20, 1
          %p267 = scmp.lt.s32.totalorder %s264, 2
          %s268 = scalar_select %p267, %s264, 2
          %s269 = smul.addr %s266, 3
          %s270 = sadd.s32 %s268, %s269
          %s271 = smul.addr %s270, 4
          %s272 = scalar_lea.vmem %s1, %s271
          %s273 = sadd.s32 %s21, 1
        $region44: #{model_forward.1} parent=35 // pred_fallthru
          _
      $region36: #{model_forward.1} parent=5 // pred_fallthru
        _
      %p274 = scmp.le.s32.totalorder 1, %s13
      %p275 = scmp.lt.s32.totalorder %s13, 5
      %p276 = pnand %p274, %p275
      %p277 = pneg %p276
      // Predicated region
      $region45: #{model_forward.1} parent=5 // pred_check
        _
      $region46: #{model_forward.1} parent=5 // pred_check_branch
        %279 = sbr.rel (%p276) target = $region48
      $region47: #{model_forward.1} parent=5 // pred_region
        %s280 = ssub.s32 %s13, 1
        %p281 = scmp.lt.s32.totalorder %s22, 1
        %s282 = scalar_select %p281, %s22, 1
        %p283 = scmp.lt.s32.totalorder %s23, 2
        %s284 = scalar_select %p283, %s23, 2
        %s285 = smul.addr %s282, 3
        %s286 = sadd.s32 %s284, %s285
        %s287 = smul.addr %s286, 4
        %s288 = scalar_lea.vmem %s0, %s287
        %p289 = pneg %p53
        %p290 = pneg %p50
        %s291 = sadd.s32 %s23, 1
        %p292 = scmp.lt.s32.totalorder %s22, 1
        %s293 = scalar_select %p292, %s22, 1
        %p294 = scmp.lt.s32.totalorder %s291, 2
        %s295 = scalar_select %p294, %s291, 2
        %s296 = smul.addr %s293, 3
        %s297 = sadd.s32 %s295, %s296
        %s298 = smul.addr %s297, 4
        %s299 = scalar_lea.vmem %s1, %s298
        %p300 = pneg %p83
        %p301 = pneg %p80
        %p302 = pneg %p104
        %p303 = pneg %p101
        %p304 = pneg %p125
        %p305 = pneg %p122
        %p306 = pneg %p146
        %p307 = pneg %p143
        %p308 = pneg %p167
        %p309 = pneg %p164
        %p310 = pneg %p188
        %p311 = pneg %p185
        %p312 = pneg %p216
        %p313 = pneg %p213
        %s314 = sand.u32 %s203, 1
        %s315 = sand.u32 %s203, 1
        %s316 = smul.addr %s315, 16
        %s317 = scalar_lea.vmem [#allocation2], %s316
        %p318 = scmp.lt.s32.totalorder %s22, 1
        %s319 = scalar_select %p318, %s22, 1
        %p320 = scmp.lt.s32.totalorder %s23, 2
        %s321 = scalar_select %p320, %s23, 2
        %s322 = smul.addr %s319, 3
        %s323 = sadd.s32 %s321, %s322
        %s324 = smul.addr %s323, 4
        %s325 = scalar_lea.vmem %s0, %s324
        %s326 = sadd.s32 %s23, 1
        %p327 = scmp.lt.s32.totalorder %s22, 1
        %s328 = scalar_select %p327, %s22, 1
        %p329 = scmp.lt.s32.totalorder %s326, 2
        %s330 = scalar_select %p329, %s326, 2
        %s331 = smul.addr %s328, 3
        %s332 = sadd.s32 %s330, %s331
        %s333 = smul.addr %s332, 4
        %s334 = scalar_lea.vmem %s1, %s333
        %s335 = sadd.s32 %s23, 1
        %v336 = vld [vmem:[%s325] sm:$0x7]
        %v337 = vld [vmem:[%s334] sm:$0x7]
        %v338 = vld [vmem:[%s6] sm:$0x1]
        %v339 = vld [vmem:[%s6 + $0x1] sm:$0x1]
        %v340 = vld [vmem:[%s6 + $0x2] sm:$0x1]
        %vm341 = vcmp.gt.f32.partialorder %v340, 0.5
        %v342 = vld [vmem:[%s6 + $0x3] sm:$0x1]
        %vm343 = vcmp.gt.f32.partialorder %v342, 0.5
        %345 = vrot.lane.b32.xlu0 %v336, 1
        %v346 = vpop.permute.xlu0 %345
        %vm348 = vcmask 7168
        %v349 = vlaneseq
        %v350 = vshrl.u32 %v349, 7
        %v351 = vsub.s32 0, %v350
        %v352 = vrot.slane %v338, %v351
        %v353 = vmul.f32 %v346, %v352
        %354 = vrot.lane.b32.xlu0 %v336, 127
        %v355 = vpop.permute.xlu0 %354
        %vm357 = vcmask 1039360
        %v358 = vlaneseq
        %v359 = vshrl.u32 %v358, 7
        %v360 = vsub.s32 0, %v359
        %v361 = vrot.slane %v339, %v360
        %v362 = vmul.f32 %v355, %v361
        %364 = vrot.lane.b32.xlu0 %v337, 113
        %v365 = vpop.permute.xlu0 %364
        %367 = vrot.lane.b32.xlu0 %v336, 113
        %v368 = vpop.permute.xlu0 %367
        %vm369 = vcmask 924672
        %v370 = vsel %vm369, %v368, %v365
        %v372 = vsel %vm348, %v365, %v370
        %v373 = vmul.f32 %v372, %v352
        %374 = vrot.lane.b32.xlu0 %v336, 111
        %v375 = vpop.permute.xlu0 %374
        %376 = vrot.lane.b32.xlu0 %v337, 111
        %v377 = vpop.permute.xlu0 %376
        %vm378 = vcmask 908288
        %v379 = vsel %vm378, %v375, %v377
        %v382 = vsel %vm357, %v379, %v375
        %v383 = vmul.f32 %v382, %v361
        %384 = vrot.lane.b32.xlu0 %v337, 97
        %v385 = vpop.permute.xlu0 %384
        %387 = vrot.lane.b32.xlu0 %v336, 97
        %v388 = vpop.permute.xlu0 %387
        %vm389 = vcmask 793600
        %v390 = vsel %vm389, %v388, %v385
        %v392 = vsel %vm348, %v385, %v390
        %v393 = vmul.f32 %v392, %v352
        %394 = vrot.lane.b32.xlu0 %v336, 95
        %v395 = vpop.permute.xlu0 %394
        %396 = vrot.lane.b32.xlu0 %v337, 95
        %v397 = vpop.permute.xlu0 %396
        %vm398 = vcmask 777216
        %v399 = vsel %vm398, %v395, %v397
        %v402 = vsel %vm357, %v399, %v395
        %v403 = vmul.f32 %v402, %v361
        %v404 = vrot.slane %v336, 5
        %v407 = vrot.slane %v362, 2
        %v410 = vrot.slane %v373, 7
        %v412 = vrot.slane %v336, 4
        %v413 = vrot.slane %v337, 4
        %414 = vrot.lane.b32.xlu0 %v412, 112
        %v415 = vpop.permute.xlu0 %414
        %416 = vrot.lane.b32.xlu0 %v413, 112
        %v417 = vpop.permute.xlu0 %416
        %vm418 = vcmask 916480
        %v419 = vsel %vm418, %v415, %v417
        %v422 = vrot.slane %v383, 1
        %v425 = vrot.slane %v393, 6
        %v427 = vrot.slane %v336, 3
        %v428 = vrot.slane %v337, 3
        %429 = vrot.lane.b32.xlu0 %v427, 96
        %v430 = vpop.permute.xlu0 %429
        %431 = vrot.lane.b32.xlu0 %v428, 96
        %v432 = vpop.permute.xlu0 %431
        %vm433 = vcmask 785408
        %v434 = vsel %vm433, %v430, %v432
        %vm436 = vcmask 1042432
        %v437 = vsel %vm436, %v353, %v404
        %vm438 = vcmask 1045504
        %v439 = vsel %vm438, %v437, %v407
        %vm440 = vcmask 1040384
        %v441 = vsel %vm440, %v407, %v410
        %vm442 = vcmask 1043456
        %v443 = vsel %vm442, %v441, %v419
        %vm444 = vcmask 1046528
        %v445 = vsel %vm444, %v443, %v422
        %vm446 = vcmask 1041408
        %v447 = vsel %vm446, %v422, %v425
        %vm448 = vcmask 1044480
        %v449 = vsel %vm448, %v447, %v434
        %v450 = vld [vmem:[%s2] sm:$0xff]
        %v451 = vld [vmem:[%s2 + $0x8] sm:$0x7f]
        %v452 = vld [vmem:[%s3] sm:$0xff]
        %v453 = vld [vmem:[%s3 + $0x8] sm:$0x7f]
        %455 = vset.pattern.permute.xlu0 0
        %456 = vperm.xlu0 %455, %v452
        %v457 = vpop.permute.xlu0 %456
        %460 = vset.pattern.permute.xlu0 0
        %461 = vperm.xlu0 %460, %v453
        %v462 = vpop.permute.xlu0 %461
        %vm464 = vcmask 220160
        %v466 = vsel %vm464, %v450, 0
        %v469 = vsel %vm464, %v451, 0
        %v472 = vsel %vm436, %v403, 0
        %474 = vmatprep.subr.mxu0 0.0
        %475 = vmatpush1.msra.mxu0 %v439
        %476 = vmatprep.subr.mxu0 0.0
        %477 = vmatpush1.msra.mxu0 %v445
        %478 = vmatprep.subr.mxu0 0.0
        %479 = vmatpush1.msra.mxu0 %v449
        %480 = vmatprep.subr.mxu0 0.0
        %481 = vmatpush1.msra.mxu0 %v472
        %482 = vmatprep.subr.mxu0 0.0
        %483 = vmatpush1.msra.mxu0 0.0
        %484 = vmatprep.subr.mxu0 0.0
        %485 = vmatpush1.msra.mxu0 0.0
        %486 = vmatprep.subr.mxu0 0.0
        %487 = vmatpush1.msra.mxu0 0.0
        %488 = vmatprep.subr.mxu0 0.0
        %489 = vmatpush1.msra.mxu0 0.0
        %490 = vmatprep.subr.mxu0 0.0
        %491 = vmatpush1.msra.mxu0 0.0
        %492 = vmatprep.subr.mxu0 0.0
        %493 = vmatpush1.msra.mxu0 0.0
        %494 = vmatprep.subr.mxu0 0.0
        %495 = vmatpush1.msra.mxu0 0.0
        %496 = vmatprep.subr.mxu0 0.0
        %497 = vmatpush1.msra.mxu0 0.0
        %498 = vmatprep.subr.mxu0 0.0
        %499 = vmatpush1.msra.mxu0 0.0
        %500 = vmatprep.subr.mxu0 0.0
        %501 = vmatpush1.msra.mxu0 0.0
        %502 = vmatprep.subr.mxu0 0.0
        %503 = vmatpush1.msra.mxu0 0.0
        %504 = vmatprep.subr.mxu0 0.0
        %505 = vmatpush1.msra.mxu0 0.0
        %506 = vmatprep.subr.mxu0 0.0
        %507 = vmatpush1.msra.mxu0 0.0
        %508 = vmatprep.subr.mxu0 0.0
        %509 = vmatpush1.msra.mxu0 0.0
        %510 = vmatprep.subr.mxu0 0.0
        %511 = vmatpush1.msra.mxu0 0.0
        %512 = vmatprep.subr.mxu0 0.0
        %513 = vmatpush1.msra.mxu0 0.0
        %514 = vmatprep.subr.mxu0 0.0
        %515 = vmatpush1.msra.mxu0 0.0
        %516 = vmatprep.subr.mxu0 0.0
        %517 = vmatpush1.msra.mxu0 0.0
        %518 = vmatprep.subr.mxu0 0.0
        %519 = vmatpush1.msra.mxu0 0.0
        %520 = vmatprep.subr.mxu0 0.0
        %521 = vmatpush1.msra.mxu0 0.0
        %522 = vmatprep.subr.mxu0 0.0
        %523 = vmatpush1.msra.mxu0 0.0
        %524 = vmatprep.subr.mxu0 0.0
        %525 = vmatpush1.msra.mxu0 0.0
        %526 = vmatprep.subr.mxu0 0.0
        %527 = vmatpush1.msra.mxu0 0.0
        %528 = vmatprep.subr.mxu0 0.0
        %529 = vmatpush1.msra.mxu0 0.0
        %530 = vmatprep.subr.mxu0 0.0
        %531 = vmatpush1.msra.mxu0 0.0
        %532 = vmatprep.subr.mxu0 0.0
        %533 = vmatpush1.msra.mxu0 0.0
        %534 = vmatprep.subr.mxu0 0.0
        %535 = vmatpush1.msra.mxu0 0.0
        %536 = vmatprep.subr.mxu0 0.0
        %537 = vmatpush1.msra.mxu0 0.0
        %538 = vmatprep.mubr.f32.mxu0 0.0
        %539 = vmatmul.mubr.f32.gmra.mrb[0].mxu0 %v466
        %v540 = vpop.f32.mrb[0].mxu0
        %v541 = vadd.f32 %v457, %v540
        %v542 = vpop.f32.mrb[0].mxu0
        %543 = vmatprep.mubr.f32.mxu0 0.0
        %544 = vmatmul.mubr.f32.gmra.mrb[0].mxu0 %v469
        %v545 = vpop.f32.mrb[0].mxu0
        %v546 = vadd.f32 %v462, %v545
        %v547 = vpop.f32.mrb[0].mxu0
        %548 = vdwg.mxu0
        %v549 = vmax.f32 %v541, 0.0
        %v550 = vmax.f32 %v546, 0.0
        %553 = vrot.lane.b32.xlu0 %v549, 127
        %v554 = vpop.permute.xlu0 %553
        %555 = vrot.lane.b32.xlu0 %v550, 127
        %v556 = vpop.permute.xlu0 %555
        %559 = vrot.lane.b32.xlu0 %v549, 1
        %v560 = vpop.permute.xlu0 %559
        %561 = vrot.lane.b32.xlu0 %v550, 1
        %v562 = vpop.permute.xlu0 %561
        %v565 = vsel %vm341, 1, 0
        %v566 = vlaneseq
        %v567 = vshrl.u32 %v566, 7
        %v568 = vsub.s32 0, %v567
        %v569 = vrot.slane %v565, %v568
        %vm570 = vcmp.eq.s32.totalorder %v569, 1
        %v571 = vsel %vm570, %v554, %v560
        %v572 = vsel %vm570, %v556, %v562
        %v573 = vmax.f32 %v549, %v571
        %v574 = vmax.f32 %v550, %v572
        %577 = vrot.lane.b32.xlu0 %v573, 112
        %v578 = vpop.permute.xlu0 %577
        %579 = vrot.lane.b32.xlu0 %v574, 112
        %v580 = vpop.permute.xlu0 %579
        %583 = vrot.lane.b32.xlu0 %v573, 16
        %v584 = vpop.permute.xlu0 %583
        %585 = vrot.lane.b32.xlu0 %v574, 16
        %v586 = vpop.permute.xlu0 %585
        %v589 = vsel %vm343, 1, 0
        %v590 = vlaneseq
        %v591 = vshrl.u32 %v590, 7
        %v592 = vsub.s32 0, %v591
        %v593 = vrot.slane %v589, %v592
        %vm594 = vcmp.eq.s32.totalorder %v593, 1
        %v595 = vsel %vm594, %v578, %v584
        %v596 = vsel %vm594, %v580, %v586
        %v597 = vmax.f32 %v573, %v595
        %v598 = vmax.f32 %v574, %v596
        %v599 = vld [vmem:[%s4] sm:$0xff]
        %v600 = vld [vmem:[%s4 + $0x8] sm:$0x3]
        %s601 = scalar_lea.vmem %s4, 16
        %v602 = vld [vmem:[%s601] sm:$0xff]
        %v603 = vld [vmem:[%s601 + $0x8] sm:$0x3]
        %vm604 = vcmask 121856
        %v606 = vsel %vm604, %v602, 0
        %v609 = vsel %vm604, %v603, 0
        %v612 = vsel %vm444, %v598, 0
        %614 = vmatprep.subr.mxu0 0.0
        %615 = vmatpush1.msra.mxu0 %v597
        %616 = vmatprep.subr.mxu0 0.0
        %617 = vmatpush1.msra.mxu0 %v612
        %618 = vmatprep.subr.mxu0 0.0
        %619 = vmatpush1.msra.mxu0 0.0
        %620 = vmatprep.subr.mxu0 0.0
        %621 = vmatpush1.msra.mxu0 0.0
        %622 = vmatprep.subr.mxu0 0.0
        %623 = vmatpush1.msra.mxu0 0.0
        %624 = vmatprep.subr.mxu0 0.0
        %625 = vmatpush1.msra.mxu0 0.0
        %626 = vmatprep.subr.mxu0 0.0
        %627 = vmatpush1.msra.mxu0 0.0
        %628 = vmatprep.subr.mxu0 0.0
        %629 = vmatpush1.msra.mxu0 0.0
        %630 = vmatprep.subr.mxu0 0.0
        %631 = vmatpush1.msra.mxu0 0.0
        %632 = vmatprep.subr.mxu0 0.0
        %633 = vmatpush1.msra.mxu0 0.0
        %634 = vmatprep.subr.mxu0 0.0
        %635 = vmatpush1.msra.mxu0 0.0
        %636 = vmatprep.subr.mxu0 0.0
        %637 = vmatpush1.msra.mxu0 0.0
        %638 = vmatprep.subr.mxu0 0.0
        %639 = vmatpush1.msra.mxu0 0.0
        %640 = vmatprep.subr.mxu0 0.0
        %641 = vmatpush1.msra.mxu0 0.0
        %642 = vmatprep.subr.mxu0 0.0
        %643 = vmatpush1.msra.mxu0 0.0
        %644 = vmatprep.subr.mxu0 0.0
        %645 = vmatpush1.msra.mxu0 0.0
        %646 = vmatprep.subr.mxu0 0.0
        %647 = vmatpush1.msra.mxu0 0.0
        %648 = vmatprep.subr.mxu0 0.0
        %649 = vmatpush1.msra.mxu0 0.0
        %650 = vmatprep.subr.mxu0 0.0
        %651 = vmatpush1.msra.mxu0 0.0
        %652 = vmatprep.subr.mxu0 0.0
        %653 = vmatpush1.msra.mxu0 0.0
        %654 = vmatprep.subr.mxu0 0.0
        %655 = vmatpush1.msra.mxu0 0.0
        %656 = vmatprep.subr.mxu0 0.0
        %657 = vmatpush1.msra.mxu0 0.0
        %658 = vmatprep.subr.mxu0 0.0
        %659 = vmatpush1.msra.mxu0 0.0
        %660 = vmatprep.subr.mxu0 0.0
        %661 = vmatpush1.msra.mxu0 0.0
        %662 = vmatprep.subr.mxu0 0.0
        %663 = vmatpush1.msra.mxu0 0.0
        %664 = vmatprep.subr.mxu0 0.0
        %665 = vmatpush1.msra.mxu0 0.0
        %666 = vmatprep.subr.mxu0 0.0
        %667 = vmatpush1.msra.mxu0 0.0
        %668 = vmatprep.subr.mxu0 0.0
        %669 = vmatpush1.msra.mxu0 0.0
        %670 = vmatprep.subr.mxu0 0.0
        %671 = vmatpush1.msra.mxu0 0.0
        %672 = vmatprep.subr.mxu0 0.0
        %673 = vmatpush1.msra.mxu0 0.0
        %674 = vmatprep.subr.mxu0 0.0
        %675 = vmatpush1.msra.mxu0 0.0
        %676 = vmatprep.subr.mxu0 0.0
        %677 = vmatpush1.msra.mxu0 0.0
        %678 = vmatprep.mubr.f32.mxu0 0.0
        %679 = vmatmul.mubr.f32.gmra.mrb[0].mxu0 %v606
        %v680 = vpop.f32.mrb[0].mxu0
        %v681 = vadd.f32 0.0, %v680
        %v682 = vpop.f32.mrb[0].mxu0
        %683 = vmatprep.mubr.f32.mxu0 0.0
        %684 = vmatmul.mubr.f32.gmra.mrb[0].mxu0 %v609
        %v685 = vpop.f32.mrb[0].mxu0
        %v686 = vadd.f32 0.0, %v685
        %v687 = vpop.f32.mrb[0].mxu0
        %688 = vdwg.mxu0
        %s689 = scalar_lea.vmem %s4, 32
        %v690 = vld [vmem:[%s689] sm:$0xff]
        %v691 = vld [vmem:[%s689 + $0x8] sm:$0x3]
        %v693 = vsel %vm604, %v690, 0
        %v696 = vsel %vm604, %v691, 0
        %698 = vmatprep.subr.mxu0 0.0
        %699 = vmatpush1.msra.mxu0 %v597
        %700 = vmatprep.subr.mxu0 0.0
        %701 = vmatpush1.msra.mxu0 %v612
        %702 = vmatprep.subr.mxu0 0.0
        %703 = vmatpush1.msra.mxu0 0.0
        %704 = vmatprep.subr.mxu0 0.0
        %705 = vmatpush1.msra.mxu0 0.0
        %706 = vmatprep.subr.mxu0 0.0
        %707 = vmatpush1.msra.mxu0 0.0
        %708 = vmatprep.subr.mxu0 0.0
        %709 = vmatpush1.msra.mxu0 0.0
        %710 = vmatprep.subr.mxu0 0.0
        %711 = vmatpush1.msra.mxu0 0.0
        %712 = vmatprep.subr.mxu0 0.0
        %713 = vmatpush1.msra.mxu0 0.0
        %714 = vmatprep.subr.mxu0 0.0
        %715 = vmatpush1.msra.mxu0 0.0
        %716 = vmatprep.subr.mxu0 0.0
        %717 = vmatpush1.msra.mxu0 0.0
        %718 = vmatprep.subr.mxu0 0.0
        %719 = vmatpush1.msra.mxu0 0.0
        %720 = vmatprep.subr.mxu0 0.0
        %721 = vmatpush1.msra.mxu0 0.0
        %722 = vmatprep.subr.mxu0 0.0
        %723 = vmatpush1.msra.mxu0 0.0
        %724 = vmatprep.subr.mxu0 0.0
        %725 = vmatpush1.msra.mxu0 0.0
        %726 = vmatprep.subr.mxu0 0.0
        %727 = vmatpush1.msra.mxu0 0.0
        %728 = vmatprep.subr.mxu0 0.0
        %729 = vmatpush1.msra.mxu0 0.0
        %730 = vmatprep.subr.mxu0 0.0
        %731 = vmatpush1.msra.mxu0 0.0
        %732 = vmatprep.subr.mxu0 0.0
        %733 = vmatpush1.msra.mxu0 0.0
        %734 = vmatprep.subr.mxu0 0.0
        %735 = vmatpush1.msra.mxu0 0.0
        %736 = vmatprep.subr.mxu0 0.0
        %737 = vmatpush1.msra.mxu0 0.0
        %738 = vmatprep.subr.mxu0 0.0
        %739 = vmatpush1.msra.mxu0 0.0
        %740 = vmatprep.subr.mxu0 0.0
        %741 = vmatpush1.msra.mxu0 0.0
        %742 = vmatprep.subr.mxu0 0.0
        %743 = vmatpush1.msra.mxu0 0.0
        %744 = vmatprep.subr.mxu0 0.0
        %745 = vmatpush1.msra.mxu0 0.0
        %746 = vmatprep.subr.mxu0 0.0
        %747 = vmatpush1.msra.mxu0 0.0
        %748 = vmatprep.subr.mxu0 0.0
        %749 = vmatpush1.msra.mxu0 0.0
        %750 = vmatprep.subr.mxu0 0.0
        %751 = vmatpush1.msra.mxu0 0.0
        %752 = vmatprep.subr.mxu0 0.0
        %753 = vmatpush1.msra.mxu0 0.0
        %754 = vmatprep.subr.mxu0 0.0
        %755 = vmatpush1.msra.mxu0 0.0
        %756 = vmatprep.subr.mxu0 0.0
        %757 = vmatpush1.msra.mxu0 0.0
        %758 = vmatprep.subr.mxu0 0.0
        %759 = vmatpush1.msra.mxu0 0.0
        %760 = vmatprep.subr.mxu0 0.0
        %761 = vmatpush1.msra.mxu0 0.0
        %762 = vmatprep.mubr.f32.mxu0 0.0
        %763 = vmatmul.mubr.f32.gmra.mrb[0].mxu0 %v693
        %v764 = vpop.f32.mrb[0].mxu0
        %v765 = vadd.f32 0.0, %v764
        %v766 = vpop.f32.mrb[0].mxu0
        %767 = vmatprep.mubr.f32.mxu0 0.0
        %768 = vmatmul.mubr.f32.gmra.mrb[0].mxu0 %v696
        %v769 = vpop.f32.mrb[0].mxu0
        %v770 = vadd.f32 0.0, %v769
        %v771 = vpop.f32.mrb[0].mxu0
        %772 = vdwg.mxu0
        %s773 = scalar_lea.vmem %s4, 48
        %v774 = vld [vmem:[%s773] sm:$0xff]
        %v775 = vld [vmem:[%s773 + $0x8] sm:$0x3]
        %v777 = vsel %vm604, %v774, 0
        %v780 = vsel %vm604, %v775, 0
        %782 = vmatprep.subr.mxu0 0.0
        %783 = vmatpush1.msra.mxu0 %v597
        %784 = vmatprep.subr.mxu0 0.0
        %785 = vmatpush1.msra.mxu0 %v612
        %786 = vmatprep.subr.mxu0 0.0
        %787 = vmatpush1.msra.mxu0 0.0
        %788 = vmatprep.subr.mxu0 0.0
        %789 = vmatpush1.msra.mxu0 0.0
        %790 = vmatprep.subr.mxu0 0.0
        %791 = vmatpush1.msra.mxu0 0.0
        %792 = vmatprep.subr.mxu0 0.0
        %793 = vmatpush1.msra.mxu0 0.0
        %794 = vmatprep.subr.mxu0 0.0
        %795 = vmatpush1.msra.mxu0 0.0
        %796 = vmatprep.subr.mxu0 0.0
        %797 = vmatpush1.msra.mxu0 0.0
        %798 = vmatprep.subr.mxu0 0.0
        %799 = vmatpush1.msra.mxu0 0.0
        %800 = vmatprep.subr.mxu0 0.0
        %801 = vmatpush1.msra.mxu0 0.0
        %802 = vmatprep.subr.mxu0 0.0
        %803 = vmatpush1.msra.mxu0 0.0
        %804 = vmatprep.subr.mxu0 0.0
        %805 = vmatpush1.msra.mxu0 0.0
        %806 = vmatprep.subr.mxu0 0.0
        %807 = vmatpush1.msra.mxu0 0.0
        %808 = vmatprep.subr.mxu0 0.0
        %809 = vmatpush1.msra.mxu0 0.0
        %810 = vmatprep.subr.mxu0 0.0
        %811 = vmatpush1.msra.mxu0 0.0
        %812 = vmatprep.subr.mxu0 0.0
        %813 = vmatpush1.msra.mxu0 0.0
        %814 = vmatprep.subr.mxu0 0.0
        %815 = vmatpush1.msra.mxu0 0.0
        %816 = vmatprep.subr.mxu0 0.0
        %817 = vmatpush1.msra.mxu0 0.0
        %818 = vmatprep.subr.mxu0 0.0
        %819 = vmatpush1.msra.mxu0 0.0
        %820 = vmatprep.subr.mxu0 0.0
        %821 = vmatpush1.msra.mxu0 0.0
        %822 = vmatprep.subr.mxu0 0.0
        %823 = vmatpush1.msra.mxu0 0.0
        %824 = vmatprep.subr.mxu0 0.0
        %825 = vmatpush1.msra.mxu0 0.0
        %826 = vmatprep.subr.mxu0 0.0
        %827 = vmatpush1.msra.mxu0 0.0
        %828 = vmatprep.subr.mxu0 0.0
        %829 = vmatpush1.msra.mxu0 0.0
        %830 = vmatprep.subr.mxu0 0.0
        %831 = vmatpush1.msra.mxu0 0.0
        %832 = vmatprep.subr.mxu0 0.0
        %833 = vmatpush1.msra.mxu0 0.0
        %834 = vmatprep.subr.mxu0 0.0
        %835 = vmatpush1.msra.mxu0 0.0
        %836 = vmatprep.subr.mxu0 0.0
        %837 = vmatpush1.msra.mxu0 0.0
        %838 = vmatprep.subr.mxu0 0.0
        %839 = vmatpush1.msra.mxu0 0.0
        %840 = vmatprep.subr.mxu0 0.0
        %841 = vmatpush1.msra.mxu0 0.0
        %842 = vmatprep.subr.mxu0 0.0
        %843 = vmatpush1.msra.mxu0 0.0
        %844 = vmatprep.subr.mxu0 0.0
        %845 = vmatpush1.msra.mxu0 0.0
        %846 = vmatprep.mubr.f32.mxu0 0.0
        %847 = vmatmul.mubr.f32.gmra.mrb[0].mxu0 %v777
        %v848 = vpop.f32.mrb[0].mxu0
        %v849 = vadd.f32 0.0, %v848
        %v850 = vpop.f32.mrb[0].mxu0
        %851 = vmatprep.mubr.f32.mxu0 0.0
        %852 = vmatmul.mubr.f32.gmra.mrb[0].mxu0 %v780
        %v853 = vpop.f32.mrb[0].mxu0
        %v854 = vadd.f32 0.0, %v853
        %v855 = vpop.f32.mrb[0].mxu0
        %856 = vdwg.mxu0
        %s857 = scalar_lea.vmem %s4, 64
        %v858 = vld [vmem:[%s857] sm:$0xff]
        %v859 = vld [vmem:[%s857 + $0x8] sm:$0x3]
        %v861 = vsel %vm604, %v858, 0
        %v864 = vsel %vm604, %v859, 0
        %866 = vmatprep.subr.mxu0 0.0
        %867 = vmatpush1.msra.mxu0 %v597
        %868 = vmatprep.subr.mxu0 0.0
        %869 = vmatpush1.msra.mxu0 %v612
        %870 = vmatprep.subr.mxu0 0.0
        %871 = vmatpush1.msra.mxu0 0.0
        %872 = vmatprep.subr.mxu0 0.0
        %873 = vmatpush1.msra.mxu0 0.0
        %874 = vmatprep.subr.mxu0 0.0
        %875 = vmatpush1.msra.mxu0 0.0
        %876 = vmatprep.subr.mxu0 0.0
        %877 = vmatpush1.msra.mxu0 0.0
        %878 = vmatprep.subr.mxu0 0.0
        %879 = vmatpush1.msra.mxu0 0.0
        %880 = vmatprep.subr.mxu0 0.0
        %881 = vmatpush1.msra.mxu0 0.0
        %882 = vmatprep.subr.mxu0 0.0
        %883 = vmatpush1.msra.mxu0 0.0
        %884 = vmatprep.subr.mxu0 0.0
        %885 = vmatpush1.msra.mxu0 0.0
        %886 = vmatprep.subr.mxu0 0.0
        %887 = vmatpush1.msra.mxu0 0.0
        %888 = vmatprep.subr.mxu0 0.0
        %889 = vmatpush1.msra.mxu0 0.0
        %890 = vmatprep.subr.mxu0 0.0
        %891 = vmatpush1.msra.mxu0 0.0
        %892 = vmatprep.subr.mxu0 0.0
        %893 = vmatpush1.msra.mxu0 0.0
        %894 = vmatprep.subr.mxu0 0.0
        %895 = vmatpush1.msra.mxu0 0.0
        %896 = vmatprep.subr.mxu0 0.0
        %897 = vmatpush1.msra.mxu0 0.0
        %898 = vmatprep.subr.mxu0 0.0
        %899 = vmatpush1.msra.mxu0 0.0
        %900 = vmatprep.subr.mxu0 0.0
        %901 = vmatpush1.msra.mxu0 0.0
        %902 = vmatprep.subr.mxu0 0.0
        %903 = vmatpush1.msra.mxu0 0.0
        %904 = vmatprep.subr.mxu0 0.0
        %905 = vmatpush1.msra.mxu0 0.0
        %906 = vmatprep.subr.mxu0 0.0
        %907 = vmatpush1.msra.mxu0 0.0
        %908 = vmatprep.subr.mxu0 0.0
        %909 = vmatpush1.msra.mxu0 0.0
        %910 = vmatprep.subr.mxu0 0.0
        %911 = vmatpush1.msra.mxu0 0.0
        %912 = vmatprep.subr.mxu0 0.0
        %913 = vmatpush1.msra.mxu0 0.0
        %914 = vmatprep.subr.mxu0 0.0
        %915 = vmatpush1.msra.mxu0 0.0
        %916 = vmatprep.subr.mxu0 0.0
        %917 = vmatpush1.msra.mxu0 0.0
        %918 = vmatprep.subr.mxu0 0.0
        %919 = vmatpush1.msra.mxu0 0.0
        %920 = vmatprep.subr.mxu0 0.0
        %921 = vmatpush1.msra.mxu0 0.0
        %922 = vmatprep.subr.mxu0 0.0
        %923 = vmatpush1.msra.mxu0 0.0
        %924 = vmatprep.subr.mxu0 0.0
        %925 = vmatpush1.msra.mxu0 0.0
        %926 = vmatprep.subr.mxu0 0.0
        %927 = vmatpush1.msra.mxu0 0.0
        %928 = vmatprep.subr.mxu0 0.0
        %929 = vmatpush1.msra.mxu0 0.0
        %930 = vmatprep.mubr.f32.mxu0 0.0
        %931 = vmatmul.mubr.f32.gmra.mrb[0].mxu0 %v861
        %v932 = vpop.f32.mrb[0].mxu0
        %v933 = vadd.f32 0.0, %v932
        %v934 = vpop.f32.mrb[0].mxu0
        %935 = vmatprep.mubr.f32.mxu0 0.0
        %936 = vmatmul.mubr.f32.gmra.mrb[0].mxu0 %v864
        %v937 = vpop.f32.mrb[0].mxu0
        %v938 = vadd.f32 0.0, %v937
        %v939 = vpop.f32.mrb[0].mxu0
        %940 = vdwg.mxu0
        %v941 = vsel %vm570, %v681, %v765
        %v942 = vsel %vm570, %v686, %v770
        %v943 = vsel %vm570, %v849, %v933
        %v944 = vsel %vm570, %v854, %v938
        %v945 = vsel %vm594, %v941, %v943
        %v946 = vsel %vm594, %v942, %v944
        %v948 = vsel %vm604, %v599, 0
        %v951 = vsel %vm604, %v600, 0
        %v953 = vsel %vm444, %v550, 0
        %955 = vmatprep.subr.mxu0 0.0
        %956 = vmatpush1.msra.mxu0 %v549
        %957 = vmatprep.subr.mxu0 0.0
        %958 = vmatpush1.msra.mxu0 %v953
        %959 = vmatprep.subr.mxu0 0.0
        %960 = vmatpush1.msra.mxu0 0.0
        %961 = vmatprep.subr.mxu0 0.0
        %962 = vmatpush1.msra.mxu0 0.0
        %963 = vmatprep.subr.mxu0 0.0
        %964 = vmatpush1.msra.mxu0 0.0
        %965 = vmatprep.subr.mxu0 0.0
        %966 = vmatpush1.msra.mxu0 0.0
        %967 = vmatprep.subr.mxu0 0.0
        %968 = vmatpush1.msra.mxu0 0.0
        %969 = vmatprep.subr.mxu0 0.0
        %970 = vmatpush1.msra.mxu0 0.0
        %971 = vmatprep.subr.mxu0 0.0
        %972 = vmatpush1.msra.mxu0 0.0
        %973 = vmatprep.subr.mxu0 0.0
        %974 = vmatpush1.msra.mxu0 0.0
        %975 = vmatprep.subr.mxu0 0.0
        %976 = vmatpush1.msra.mxu0 0.0
        %977 = vmatprep.subr.mxu0 0.0
        %978 = vmatpush1.msra.mxu0 0.0
        %979 = vmatprep.subr.mxu0 0.0
        %980 = vmatpush1.msra.mxu0 0.0
        %981 = vmatprep.subr.mxu0 0.0
        %982 = vmatpush1.msra.mxu0 0.0
        %983 = vmatprep.subr.mxu0 0.0
        %984 = vmatpush1.msra.mxu0 0.0
        %985 = vmatprep.subr.mxu0 0.0
        %986 = vmatpush1.msra.mxu0 0.0
        %987 = vmatprep.subr.mxu0 0.0
        %988 = vmatpush1.msra.mxu0 0.0
        %989 = vmatprep.subr.mxu0 0.0
        %990 = vmatpush1.msra.mxu0 0.0
        %991 = vmatprep.subr.mxu0 0.0
        %992 = vmatpush1.msra.mxu0 0.0
        %993 = vmatprep.subr.mxu0 0.0
        %994 = vmatpush1.msra.mxu0 0.0
        %995 = vmatprep.subr.mxu0 0.0
        %996 = vmatpush1.msra.mxu0 0.0
        %997 = vmatprep.subr.mxu0 0.0
        %998 = vmatpush1.msra.mxu0 0.0
        %999 = vmatprep.subr.mxu0 0.0
        %1000 = vmatpush1.msra.mxu0 0.0
        %1001 = vmatprep.subr.mxu0 0.0
        %1002 = vmatpush1.msra.mxu0 0.0
        %1003 = vmatprep.subr.mxu0 0.0
        %1004 = vmatpush1.msra.mxu0 0.0
        %1005 = vmatprep.subr.mxu0 0.0
        %1006 = vmatpush1.msra.mxu0 0.0
        %1007 = vmatprep.subr.mxu0 0.0
        %1008 = vmatpush1.msra.mxu0 0.0
        %1009 = vmatprep.subr.mxu0 0.0
        %1010 = vmatpush1.msra.mxu0 0.0
        %1011 = vmatprep.subr.mxu0 0.0
        %1012 = vmatpush1.msra.mxu0 0.0
        %1013 = vmatprep.subr.mxu0 0.0
        %1014 = vmatpush1.msra.mxu0 0.0
        %1015 = vmatprep.subr.mxu0 0.0
        %1016 = vmatpush1.msra.mxu0 0.0
        %1017 = vmatprep.subr.mxu0 0.0
        %1018 = vmatpush1.msra.mxu0 0.0
        %1019 = vmatprep.mubr.f32.mxu0 0.0
        %1020 = vmatmul.mubr.f32.gmra.mrb[0].mxu0 %v948
        %v1021 = vpop.f32.mrb[0].mxu0
        %v1022 = vadd.f32 %v945, %v1021
        %v1023 = vpop.f32.mrb[0].mxu0
        %1024 = vmatprep.mubr.f32.mxu0 0.0
        %1025 = vmatmul.mubr.f32.gmra.mrb[0].mxu0 %v951
        %v1026 = vpop.f32.mrb[0].mxu0
        %v1027 = vadd.f32 %v946, %v1026
        %v1028 = vpop.f32.mrb[0].mxu0
        %1029 = vdwg.mxu0
        %v1030 = vld [vmem:[%s5] sm:$0xff]
        %v1031 = vld [vmem:[%s5 + $0x8] sm:$0x3]
        %1033 = vset.pattern.permute.xlu0 0
        %1034 = vperm.xlu0 %1033, %v1030
        %v1035 = vpop.permute.xlu0 %1034
        %1038 = vset.pattern.permute.xlu0 0
        %1039 = vperm.xlu0 %1038, %v1031
        %v1040 = vpop.permute.xlu0 %1039
        %v1042 = vadd.f32 %v1022, %v1035
        %v1043 = vadd.f32 %v1027, %v1040
        %1044 = vst [vmem:[%s317] sm:$0xff] %v1042
        %1045 = vst [vmem:[%s317 + $0x8] sm:$0x3] %v1043
        %s1046 = sand.u32 %s203, 1
        %s1047 = sand.u32 %s203, 1
        %s1048 = smul.addr %s1047, 16
        %s1049 = scalar_lea.vmem [#allocation2], %s1048
        // Predicated region
        $region49: #{model_forward.1} parent=47 // pred_check
          %p1050 = pneg %p213
        $region50: #{model_forward.1} parent=47 // pred_check_branch
          %1052 = sbr.rel (%p1050) target = $region52
        $region51: #{model_forward.1} parent=47 // pred_region
          %s1053 = smul.addr %s22, 4
          %s1054 = sadd.s32 %s23, %s1053
          %s1055 = smul.addr %s1054, 8
          %s1056 = scalar_lea.vmem %s7, %s1055
          // Predicated region
          $region53: #{model_forward.1} parent=51 // pred_check
            _
          $region54: #{model_forward.1} parent=51 // pred_check_branch
            %1058 = sbr.rel (0) target = $region56
          $region55: #{model_forward.1} parent=51 // pred_region
            // Predicated region
            $region57: #{model_forward.1} parent=55 // pred_check
              _
            $region58: #{model_forward.1} parent=55 // pred_check_branch
              %1060 = sbr.rel (0) target = $region60
            $region59: #{model_forward.1} parent=55 // pred_region
              // Predicated region
              $region72: #{model_forward.1} parent=59 // pred_check
                _
              $region73: #{model_forward.1} parent=59 // pred_check_branch
                %1077 = sbr.rel (0) target = $region75
              $region74: #{model_forward.1} parent=59 // pred_region
                loop: start=0, step=1, limit=1
                $region76: #{model_forward.1} parent=74 // loop_pre_header
                  _
                $region77: #{model_forward.1} parent=74 // loop_header
                  %s1079 = sphi 0, %s1083
                  %p1080 = scmp.ge.s32.totalorder %s1079, 1
                  %s1084 = sphi %s1049, %s1049
                  %s1085 = sphi %s1056, %s1056
                $region78: #{model_forward.1} parent=74 // loop_header_branch
                  %1082 = sbr.rel (%p1080) target = $region82
                $region79: #{model_forward.1} parent=74 // loop_body
                  %v1086 = vld [vmem:[%s1084] sm:$0xff]
                  %1087 = vst [vmem:[%s1085] sm:$0xff] %v1086
                  %v1088 = vld [vmem:[%s1084 + $0x8] sm:$0xff]
                  %1089 = vst [vmem:[%s1085 + $0x10] sm:$0xff] %v1088
                $region80: #{model_forward.1} parent=74 // loop_footer
                  %s1083 = sadd.s32 1, %s1079
                $region81: #{model_forward.1} parent=74 // loop_footer_branch
                  %1078 = sbr.rel target = $region77
                $region82: #{model_forward.1} parent=74 // loop_exit
                  _
              $region75: #{model_forward.1} parent=59 // pred_fallthru
                _
              // Predicated region
              $region83: #{model_forward.1} parent=59 // pred_check
                _
              $region84: #{model_forward.1} parent=59 // pred_check_branch
                %1091 = sbr.rel target = $region86
              $region85: #{model_forward.1} parent=59 // pred_region
                _
              $region86: #{model_forward.1} parent=59 // pred_fallthru
                _
            $region60: #{model_forward.1} parent=55 // pred_fallthru
              _
            // Predicated region
            $region61: #{model_forward.1} parent=55 // pred_check
              _
            $region62: #{model_forward.1} parent=55 // pred_check_branch
              %1062 = sbr.rel target = $region64
            $region63: #{model_forward.1} parent=55 // pred_region
              loop: start=0, step=1, limit=1
              $region65: #{model_forward.1} parent=63 // loop_pre_header
                _
              $region66: #{model_forward.1} parent=63 // loop_header
                %s1065 = sphi 0, %s1069
                %p1066 = scmp.ge.s32.totalorder %s1065, 1
                %s1070 = sphi %s1049, %s1049
                %s1071 = sphi %s1056, %s1056
              $region67: #{model_forward.1} parent=63 // loop_header_branch
                %1068 = sbr.rel (%p1066) target = $region71
              $region68: #{model_forward.1} parent=63 // loop_body
                %v1072 = vld [vmem:[%s1070] sm:$0xff]
                %1073 = vst [vmem:[%s1071] sm:$0xff] %v1072
                %v1074 = vld [vmem:[%s1070 + $0x8] sm:$0xff]
                %1075 = vst [vmem:[%s1071 + $0x10] sm:$0xff] %v1074
              $region69: #{model_forward.1} parent=63 // loop_footer
                %s1069 = sadd.s32 1, %s1065
              $region70: #{model_forward.1} parent=63 // loop_footer_branch
                %1064 = sbr.rel target = $region66
              $region71: #{model_forward.1} parent=63 // loop_exit
                _
            $region64: #{model_forward.1} parent=55 // pred_fallthru
              _
          $region56: #{model_forward.1} parent=51 // pred_fallthru
            _
          %1092 = vnop
        $region52: #{model_forward.1} parent=47 // pred_fallthru
          _
      $region48: #{model_forward.1} parent=5 // pred_fallthru
        _
      %p1093 = scmp.le.s32.totalorder 2, %s13
      // Predicated region
      $region87: #{model_forward.1} parent=5 // pred_check
        %p1094 = pneg %p1093
      $region88: #{model_forward.1} parent=5 // pred_check_branch
        %1096 = sbr.rel (%p1094) target = $region90
      $region89: #{model_forward.1} parent=5 // pred_region
        %s1097 = ssub.s32 %s13, 2
        // Predicated region
        $region91: #{model_forward.1} parent=89 // pred_check
          %p1098 = pneg %p219
        $region92: #{model_forward.1} parent=89 // pred_check_branch
          %1100 = sbr.rel (%p1098) target = $region94
        $region93: #{model_forward.1} parent=89 // pred_region
          %s1101 = sand.u32 %s204, 1
          %s1102 = sand.u32 %s204, 1
          %s1103 = smul.addr %s1102, 16
          %s1104 = scalar_lea.vmem [#allocation2], %s1103
        $region94: #{model_forward.1} parent=89 // pred_fallthru
          _
      $region90: #{model_forward.1} parent=5 // pred_fallthru
        _
    $region6: #{model_forward.1} parent=1 // loop_footer
      %s17 = sadd.s32 1, %s13
    $region7: #{model_forward.1} parent=1 // loop_footer_branch
      %12 = sbr.rel target = $region3
    $region8: #{model_forward.1} parent=1 // loop_exit
      _

</llo_original>
